<compile_context>
chip_gen: v6e
topology: v6e:2x2x1
jax: 0.10.0
libtpu: 0.0.40
codegen_flags: <defaults>
</compile_context>

<pallas_src>
import jax
import jax.numpy as jnp
from jax.experimental import pallas as pl
from jax.experimental.pallas import tpu as pltpu


def _nll_sum_kernel(tgt_ref, pred_ref, out_ref):
    """Accumulates sum_i pred[i, target[i]] over this core's row blocks.

    tgt_ref : (tile_p, L) int8/int32  flat lane index of the target, -1 = no match
    pred_ref: (tile_p, L) f32/bf16    G original rows packed along the lane axis
    out_ref : (8, L)      f32         per-core partial-sum accumulator (row 0 used)
    """
    t = pl.program_id(1)

    @pl.when(t == 0)
    def _():
        out_ref[...] = jnp.zeros_like(out_ref)

    pred = pred_ref[...]                                   # native dtype (f32/bf16)
    tgt = tgt_ref[...].astype(jnp.int32)                   # (tile_p, L)
    col = jax.lax.broadcasted_iota(jnp.int32, tgt.shape, 1)

    # One compare + one select per vreg; select keeps -inf / garbage out safely.
    picked = jnp.where(tgt == col, pred, jnp.zeros_like(pred)).astype(jnp.float32)

    # Reduce the whole tile to (1, L) and accumulate into the resident out block.
    out_ref[0:1, :] = out_ref[0:1, :] + jnp.sum(picked, axis=0, keepdims=True)


def nll_loss(pred, target, *, ignore_index=-100, tile_rows=8192):
    """pred: (N, C) log-probabilities (f32 or bf16); target: (N,) int class ids.

    Matches F.nll_loss defaults: mean over non-ignored rows (ignore_index=-100).
    If no row is valid the result is NaN (same as PyTorch).
    """
    N, C = pred.shape
    target = target.astype(jnp.int32).reshape(N)

    # ---- lane-dense packing (free bitcast reshape: G is a pow2 dividing N) ----
    if C <= 128:
        G = 1 << max(0, (128 // C).bit_length() - 1)       # largest pow2 <= 128//C
        while G > 1 and N % G:
            G //= 2
    else:
        G = 1
    L = G * C
    n_packed = N // G
    pred_packed = pred.reshape(n_packed, L)                 # contiguous -> no copy

    # ---- tile / grid geometry --------------------------------------------------
    itemsize = jnp.dtype(pred.dtype).itemsize
    tgt_dtype = jnp.int8 if L <= 128 else jnp.int32         # flat index fits int8
    tgt_itemsize = jnp.dtype(tgt_dtype).itemsize
    # Cap buffers (double-buffered pred + tgt) to ~24 MiB; tile_p multiple of 32.
    max_tile = max(32, (((24 << 20) // (2 * L * (itemsize + tgt_itemsize))) // 32) * 32)
    tile_rows = min(max(32, (int(tile_rows) // 32) * 32), max_tile)
    tile_p = n_packed if n_packed <= tile_rows else tile_rows

    num_blocks = pl.cdiv(n_packed, tile_p)
    num_cores = 2 if num_blocks >= 2 else 1                 # always engage both v7x TCs
    bpc = pl.cdiv(num_blocks, num_cores)
    total_rows = num_cores * bpc * tile_p                   # grid extent (packed rows)
    last_block = num_blocks - 1

    # ---- replicated lane-index targets (padded with -1 to full grid extent) ----
    tgt_pad = jnp.pad(target, (0, total_rows * G - N), constant_values=ignore_index)
    valid = (tgt_pad != ignore_index) & (tgt_pad >= 0) & (tgt_pad < C)
    flat = tgt_pad.reshape(total_rows, G) + (jnp.arange(G, dtype=jnp.int32) * C)[None, :]
    flat = jnp.where(valid.reshape(total_rows, G), flat, -1)
    tgt_full = jnp.repeat(flat, C, axis=1).astype(tgt_dtype)   # (total_rows, L)

    n_valid = jnp.sum(valid.astype(jnp.float32))            # rows counted by 'mean'

    vmem_limit = int(max(32 << 20,
                         min(48 << 20,
                             2 * tile_p * L * (itemsize + tgt_itemsize) + (8 << 20))))

    partials = pl.pallas_call(
        _nll_sum_kernel,
        out_shape=jax.ShapeDtypeStruct((num_cores * 8, L), jnp.float32),
        grid_spec=pltpu.PrefetchScalarGridSpec(
            num_scalar_prefetch=0,
            grid=(num_cores, bpc),
            in_specs=[
                # tgt_full is padded to the full grid extent -> never out of bounds.
                pl.BlockSpec((tile_p, L), lambda p, t: (p * bpc + t, 0)),
                # pred: clamp phantom iterations to the last real block (their tgt
                # block is all -1, so they contribute exactly zero).
                pl.BlockSpec((tile_p, L),
                             lambda p, t: (jnp.minimum(p * bpc + t, last_block), 0)),
            ],
            out_specs=pl.BlockSpec((8, L), lambda p, t: (p, 0)),
        ),
        compiler_params=pltpu.CompilerParams(
            dimension_semantics=("parallel", "arbitrary"),
            vmem_limit_bytes=vmem_limit),
    )(tgt_full, pred_packed)

    # F.nll_loss(reduction='mean'): mean over non-ignored rows.
    return -jnp.sum(partials) / n_valid


def _nll_loss_ref(pred, target, ignore_index=-100):
    C = pred.shape[1]
    valid = (target != ignore_index) & (target >= 0) & (target < C)
    safe = jnp.where(valid, target, 0)
    picked = jnp.take_along_axis(pred.astype(jnp.float32),
                                 safe.reshape(-1, 1), axis=1)[:, 0]
    picked = jnp.where(valid, picked, 0.0)
    return -jnp.sum(picked) / jnp.sum(valid.astype(jnp.float32))


if __name__ == "__main__":
    key = jax.random.PRNGKey(0)
    k1, k2, k3, k4, k5, k6 = jax.random.split(key, 6)

    # (1) Shapes consistent with the sem-seg module: pred = (B*npoints, 13) log-probs.
    N1, C1 = 2 * 128, 13
    pred1 = jax.nn.log_softmax(jax.random.normal(k1, (N1, C1), jnp.float32), axis=-1)
    tgt1 = jax.random.randint(k2, (N1,), 0, C1, dtype=jnp.int32)
    loss1 = jax.block_until_ready(nll_loss(pred1, tgt1))
    ref1 = _nll_loss_ref(pred1, tgt1)
    assert jnp.allclose(loss1, ref1, atol=1e-5, rtol=1e-5), (loss1, ref1)

    # (2) Multi-block grid, two-core split, partial tail block, ignore_index rows.
    N2, C2 = 250, 13
    pred2 = jax.nn.log_softmax(jax.random.normal(k3, (N2, C2), jnp.float32), axis=-1)
    tgt2 = jax.random.randint(k4, (N2,), 0, C2, dtype=jnp.int32)
    tgt2 = tgt2.at[::7].set(-100)
    loss2 = jax.block_until_ready(nll_loss(pred2, tgt2, tile_rows=32))
    ref2 = _nll_loss_ref(pred2, tgt2)
    assert jnp.allclose(loss2, ref2, atol=1e-5, rtol=1e-5), (loss2, ref2)

    # (3) Odd block count (clamped phantom block on core 1) + bf16 log-probs.
    N3, C3 = 640, 16
    pred3 = jax.nn.log_softmax(
        jax.random.normal(k5, (N3, C3), jnp.float32), axis=-1).astype(jnp.bfloat16)
    tgt3 = jax.random.randint(k6, (N3,), 0, C3, dtype=jnp.int32)
    loss3 = jax.block_until_ready(nll_loss(pred3, tgt3, tile_rows=32))
    ref3 = _nll_loss_ref(pred3, tgt3)
    assert jnp.allclose(loss3, ref3, atol=1e-4, rtol=1e-4), (loss3, ref3)

    print("KERNEL_OK")
</pallas_src>

<mosaic_0001>
module attributes {stable_mosaic.version = 11 : i64} {
  func.func @_nll_sum_kernel(%arg0: i32, %arg1: i32, %arg2: memref<32x104xi8, #tpu.memory_space<vmem>>, %arg3: memref<32x104xf32, #tpu.memory_space<vmem>>, %arg4: memref<8x104xf32, #tpu.memory_space<vmem>>) attributes {dimension_semantics = [#tpu.dimension_semantics<parallel>, #tpu.dimension_semantics<arbitrary>], iteration_bounds = array<i64: 1, 1>, scalar_prefetch = 0 : i64, scratch_operands = 0 : i64, tpu.core_type = #tpu.core_type<tc>, window_params = [{transform_indices = @transform_0, window_bounds = array<i64: 32, 104>}, {transform_indices = @transform_1, window_bounds = array<i64: 32, 104>}, {transform_indices = @transform_2, window_bounds = array<i64: 8, 104>}]} {
    %c0_i32 = arith.constant 0 : i32
    %0 = arith.cmpi eq, %arg1, %c0_i32 : i32
    %1 = arith.extui %0 : i1 to i32
    %c0_i32_0 = arith.constant 0 : i32
    %2 = arith.cmpi ne, %1, %c0_i32_0 : i32
    scf.if %2 {
      %cst_9 = arith.constant 0.000000e+00 : f32
      %15 = vector.broadcast %cst_9 : f32 to vector<8x104xf32>
      %c0_10 = arith.constant 0 : index
      %c0_11 = arith.constant 0 : index
      %16 = vector.load %arg4[%c0_10, %c0_11] : memref<8x104xf32, #tpu.memory_space<vmem>>, vector<8x104xf32>
      tpu.vector_store %arg4[%c0_10, %c0_11], %15 {strides = array<i32>} : memref<8x104xf32, #tpu.memory_space<vmem>>, vector<8x104xf32>,
    } else {
    }
    %c0 = arith.constant 0 : index
    %c0_1 = arith.constant 0 : index
    %3 = vector.load %arg3[%c0, %c0_1] : memref<32x104xf32, #tpu.memory_space<vmem>>, vector<32x104xf32>
    %c0_2 = arith.constant 0 : index
    %c0_3 = arith.constant 0 : index
    %4 = vector.load %arg2[%c0_2, %c0_3] : memref<32x104xi8, #tpu.memory_space<vmem>>, vector<32x104xi8>
    %5 = arith.extsi %4 : vector<32x104xi8> to vector<32x104xi32>
    %6 = tpu.iota {dimensions = array<i32: 1>} : vector<32x104xi32>
    %7 = arith.cmpi eq, %5, %6 : vector<32x104xi32>
    %cst = arith.constant 0.000000e+00 : f32
    %8 = vector.broadcast %cst : f32 to vector<32x104xf32>
    %9 = arith.select %7, %3, %8 : vector<32x104xi1>, vector<32x104xf32>
    %c0_4 = arith.constant 0 : index
    %c0_5 = arith.constant 0 : index
    %10 = vector.load %arg4[%c0_4, %c0_5] : memref<8x104xf32, #tpu.memory_space<vmem>>, vector<1x104xf32>
    %cst_6 = arith.constant dense<0.000000e+00> : vector<104xf32>
    %11 = vector.multi_reduction <add>, %9, %cst_6 [0] : vector<32x104xf32> to vector<104xf32>
    %12 = vector.shape_cast %11 : vector<104xf32> to vector<1x104xf32>
    %13 = arith.addf %10, %12 : vector<1x104xf32>
    %c0_7 = arith.constant 0 : index
    %c0_8 = arith.constant 0 : index
    %14 = vector.load %arg4[%c0_7, %c0_8] : memref<8x104xf32, #tpu.memory_space<vmem>>, vector<1x104xf32>
    tpu.vector_store %arg4[%c0_7, %c0_8], %13 {strides = array<i32>} : memref<8x104xf32, #tpu.memory_space<vmem>>, vector<1x104xf32>,
    return
  }
  func.func @transform_0(%arg0: i32, %arg1: i32) -> (i32, i32) {
    %c1_i32 = arith.constant 1 : i32
    %0 = arith.muli %arg0, %c1_i32 : i32
    %1 = arith.addi %0, %arg1 : i32
    %c0_i32 = arith.constant 0 : i32
    %c0_i32_0 = arith.constant 0 : i32
    return %1, %c0_i32 : i32, i32
  }
  func.func @transform_1(%arg0: i32, %arg1: i32) -> (i32, i32) {
    %c1_i32 = arith.constant 1 : i32
    %0 = arith.muli %arg0, %c1_i32 : i32
    %1 = arith.addi %0, %arg1 : i32
    %c0_i32 = arith.constant 0 : i32
    %2 = arith.minsi %1, %c0_i32 : i32
    %c0_i32_0 = arith.constant 0 : i32
    %c0_i32_1 = arith.constant 0 : i32
    return %2, %c0_i32_0 : i32, i32
  }
  func.func @transform_2(%arg0: i32, %arg1: i32) -> (i32, i32) {
    %c0_i32 = arith.constant 0 : i32
    %c0_i32_0 = arith.constant 0 : i32
    return %arg0, %c0_i32 : i32, i32
  }
}

</mosaic_0001>

<llo_original>
// kernel: tpu_custom_call.1
$region0: #{tpu_custom_call.1}
  #allocation0 [shape = 'u32[]', space=smem, size = 0x4, offset = 0x4, fixed_abs, tag = 'smem constant byte address 0x4 - core index']
  #allocation1 [shape = 'u32[144,128]{1,0:T(1,128)}', space=vmem, size = 0x12000, scoped, tag = 'internal scratch']
  %s0 = inlined_call_operand.hbm [shape: s8[32,104], index: 0, kind: input, shape index: {}]
  %s1 = inlined_call_operand.hbm [shape: f32[32,104], index: 1, kind: input, shape index: {}]
  %s2 = inlined_call_operand.hbm [shape: f32[8,104], index: 2, kind: output, shape index: {}]
  %s3 = sld [smem:[#allocation0]]
  $region30: #{tpu_custom_call.1} parent=0
    _
  %s5 = ssub.s32 1, %s3
  %s6 = scalar_select 0, %s5, %s3
  $region1: #{tpu_custom_call.1} parent=0
    #allocation2 [shape = 'u8[4096]{0}', space=vmem, size = 0x1000, scoped, tag = 'input window, operand 0, single buffered']
    #allocation3 [shape = 's32[1]{0}', space=sflag, size = 0x4, scoped, tag = 'scoped memory for tpu_custom_call.1']
    #allocation4 [shape = 's32[1]{0}', space=sflag, size = 0x4, scoped, tag = 'scoped memory for tpu_custom_call.1']
    #allocation5 [shape = 'u8[16384]{0}', space=vmem, size = 0x4000, scoped, tag = 'input window, operand 1, single buffered']
    #allocation6 [shape = 's32[1]{0}', space=sflag, size = 0x4, scoped, tag = 'scoped memory for tpu_custom_call.1']
    #allocation7 [shape = 'u8[4096]{0}', space=vmem, size = 0x1000, scoped, tag = 'output window, operand 0, single buffered']
    %7 = vsyncpa [#allocation3], 0
    %8 = vsyncpa [#allocation6], 0
    %9 = vsyncpa [#allocation4], 0
    // Predicated region
    $region2: #{tpu_custom_call.1} parent=1 // pred_check
      _
    $region3: #{tpu_custom_call.1} parent=1 // pred_check_branch
      %11 = sbr.rel (0) target = $region5
    $region4: #{tpu_custom_call.1} parent=1 // pred_region
      %s12 = sadd.s32 0, 0
      %s14 = ssub.s32 128, 128
      %15 = vsyncadd [#allocation3], %s14
      %s16 = smul.addr %s12, 128
      %s17 = scalar_lea.hbm %s0, %s16
      %s19 = sshll.u32 [#allocation2], 4
      %s20 = int_to_ptr.vmem [resolvable:$true] %s19
      %22 = dma.hbm_to_vmem [thread:$0]  %s17, 128, %s20, [#allocation3]
    $region5: #{tpu_custom_call.1} parent=1 // pred_fallthru
      _
    // Predicated region
    $region6: #{tpu_custom_call.1} parent=1 // pred_check
      _
    $region7: #{tpu_custom_call.1} parent=1 // pred_check_branch
      %24 = sbr.rel (0) target = $region9
    $region8: #{tpu_custom_call.1} parent=1 // pred_region
      %s25 = sadd.s32 0, 0
      %p26 = scmp.lt.s32.totalorder %s25, 0
      %s27 = scalar_select %p26, %s25, 0
      %s28 = smul.u32 4, %s27
      %s30 = ssub.s32 512, 512
      %31 = vsyncadd [#allocation6], %s30
      %s32 = smul.addr %s28, 128
      %s33 = scalar_lea.hbm %s1, %s32
      %s34 = sshll.u32 [#allocation5], 4
      %s35 = int_to_ptr.vmem [resolvable:$true] %s34
      %40 = dma.hbm_to_vmem [thread:$0]  %s33, 512, %s35, [#allocation6], 128, 128, 8
    $region9: #{tpu_custom_call.1} parent=1 // pred_fallthru
      _
    // Predicated region
    $region10: #{tpu_custom_call.1} parent=1 // pred_check
      _
    $region11: #{tpu_custom_call.1} parent=1 // pred_check_branch
      %42 = sbr.rel (0) target = $region13
    $region12: #{tpu_custom_call.1} parent=1 // pred_region
      %43 = dma.done [#allocation3], 128
    $region13: #{tpu_custom_call.1} parent=1 // pred_fallthru
      _
    // Predicated region
    $region14: #{tpu_custom_call.1} parent=1 // pred_check
      _
    $region15: #{tpu_custom_call.1} parent=1 // pred_check_branch
      %45 = sbr.rel (0) target = $region17
    $region16: #{tpu_custom_call.1} parent=1 // pred_region
      %46 = dma.done [#allocation6], 512
    $region17: #{tpu_custom_call.1} parent=1 // pred_fallthru
      _
    %s47 = sadd.s32 0, 0
    %s48 = sadd.s32 0, 0
    %p49 = scmp.lt.s32.totalorder %s48, 0
    %s50 = scalar_select %p49, %s48, 0
    %s51 = smul.u32 4, %s50
    %p52 = scmp.eq.s32.totalorder 0, 0
    // Predicated region
    $region18: #{tpu_custom_call.1} parent=1 // pred_check
      %p53 = pneg %p52
    $region19: #{tpu_custom_call.1} parent=1 // pred_check_branch
      %55 = sbr.rel (%p53) target = $region21
    $region20: #{tpu_custom_call.1} parent=1 // pred_region
      %vm56 = vcmask 850944
      %57 = vst.msk [vmem:[#allocation7] sm:$0xff] %vm56, 0.0
    $region21: #{tpu_custom_call.1} parent=1 // pred_fallthru
      _
    %v58 = vld [vmem:[#allocation5] sm:$0xff]
    %v59 = vld [vmem:[#allocation5 + $0x8] sm:$0xff]
    %v60 = vld [vmem:[#allocation5 + $0x10] sm:$0xff]
    %v61 = vld [vmem:[#allocation5 + $0x18] sm:$0xff]
    %v62 = vld [vmem:[#allocation2] sm:$0xff]
    %v63 = vunpack.c.0.s8 %v62
    %v64 = vunpack.c.1.s8 %v62
    %v65 = vunpack.c.2.s8 %v62
    %v66 = vunpack.c.3.s8 %v62
    %v67 = vlaneseq
    %v68 = vand.u32 %v67, 127
    %vm69 = vcmp.eq.s32.totalorder %v63, %v68
    %vm70 = vcmp.eq.s32.totalorder %v64, %v68
    %vm71 = vcmp.eq.s32.totalorder %v65, %v68
    %vm72 = vcmp.eq.s32.totalorder %v66, %v68
    %v73 = vsel %vm69, %v58, 0.0
    %v74 = vsel %vm70, %v59, 0.0
    %v75 = vsel %vm71, %v60, 0.0
    %v76 = vsel %vm72, %v61, 0.0
    %v77 = vld [vmem:[#allocation7] sm:$0x1]
    %vm78 = vcmask 850944
    %v79 = vsel %vm78, %v73, 0.0
    %v80 = vsel %vm78, %v74, 0.0
    %v81 = vadd.f32 %v79, %v80
    %v82 = vsel %vm78, %v75, 0.0
    %v83 = vadd.f32 %v81, %v82
    %v84 = vsel %vm78, %v76, 0.0
    %v85 = vadd.f32 %v83, %v84
    %v86 = vrot.slane %v85, 4
    %v87 = vadd.f32 %v85, %v86
    %v88 = vrot.slane %v87, 2
    %v89 = vadd.f32 %v87, %v88
    %v90 = vrot.slane %v89, 1
    %v91 = vadd.f32 %v89, %v90
    %v92 = vadd.f32 %v77, %v91
    %vm93 = vcmask 843776
    %94 = vst.msk [vmem:[#allocation7] sm:$0x1] %vm93, %v92
    // Predicated region
    $region22: #{tpu_custom_call.1} parent=1 // pred_check
      _
    $region23: #{tpu_custom_call.1} parent=1 // pred_check_branch
      %96 = sbr.rel (0) target = $region25
    $region24: #{tpu_custom_call.1} parent=1 // pred_region
      %s98 = ssub.s32 128, 128
      %99 = vsyncadd [#allocation4], %s98
      %s101 = sshll.u32 [#allocation7], 4
      %s102 = int_to_ptr.vmem [resolvable:$true] %s101
      %104 = dma.vmem_to_hbm [thread:$0]  %s102, 128, %s2, [#allocation4]
    $region25: #{tpu_custom_call.1} parent=1 // pred_fallthru
      _
    // Predicated region
    $region26: #{tpu_custom_call.1} parent=1 // pred_check
      _
    $region27: #{tpu_custom_call.1} parent=1 // pred_check_branch
      %106 = sbr.rel (0) target = $region29
    $region28: #{tpu_custom_call.1} parent=1 // pred_region
      %107 = dma.done [#allocation4], 128
    $region29: #{tpu_custom_call.1} parent=1 // pred_fallthru
      _
    %108 = vsyncpa [#allocation3], 1
    %109 = vsyncpa [#allocation6], 1
    %110 = vsyncpa [#allocation4], 1

</llo_original>
